<compile_context>
chip_gen: v5e
topology: v5e:2x2
jax: 0.10.0
libtpu: 0.0.40
codegen_flags: <defaults>
</compile_context>

<pallas_src>
import jax
import jax.numpy as jnp
from jax.experimental import pallas as pl
from jax.experimental.pallas import tpu as pltpu

EPS = 1e-5  # torch.nn.LayerNorm default


def _round_up(x, m):
    return ((x + m - 1) // m) * m


def prenorm_linear_kernel(x_ref, gamma_ref, beta_ref, w_ref, b_ref, o_ref):
    # --- LayerNorm over last dim (biased variance, f32 stats) ---
    xf = x_ref[...].astype(jnp.float32)                   # [TM, D]
    mean = jnp.mean(xf, axis=-1, keepdims=True)           # [TM, 1]
    mean_sq = jnp.mean(xf * xf, axis=-1, keepdims=True)   # [TM, 1]
    var = jnp.maximum(mean_sq - mean * mean, 0.0)         # clamp cancellation
    inv = jax.lax.rsqrt(var + EPS)                        # EUP (free slot)

    gamma = gamma_ref[...].astype(jnp.float32)            # [1, D]
    beta = beta_ref[...].astype(jnp.float32)              # [1, D]
    y = (xf - mean) * inv * gamma + beta                  # [TM, D]

    # --- fn: Linear(D -> H) on the MXU, f32 accumulation ---
    w = w_ref[...]                                        # [D, Hp], native dtype
    out = jnp.dot(y.astype(w.dtype), w,
                  preferred_element_type=jnp.float32)     # [TM, Hp]
    out = out + b_ref[...].astype(jnp.float32)
    o_ref[...] = out.astype(o_ref.dtype)


def prenorm_linear(x, gamma, beta, w, b, *, tm=512):
    """PreNorm(dim=D, fn=Linear(D, H)):  x [B, N, D] -> [B, N, H]."""
    B, N, D = x.shape
    H = w.shape[1]
    M = B * N

    # Row tile: multiple of 8 (sublane), capped at `tm` so the double-buffered
    # input/output tiles plus the resident weight stay well inside the scoped
    # VMEM defaults on all generations (v5e 16 MiB / v6e 32 MiB / v7x 64 MiB).
    TM = min(tm, _round_up(M, 8))
    M_pad = _round_up(M, TM)

    # Lane-dense output: pad H up to a multiple of 128 (unmasked stores).
    H_pad = _round_up(H, 128)

    xf = x.reshape(M, D)
    if M_pad != M:
        xf = jnp.pad(xf, ((0, M_pad - M), (0, 0)))        # zero rows, sliced off later
    gamma2 = gamma.reshape(1, D)
    beta2 = beta.reshape(1, D)
    w_p = w if H_pad == H else jnp.pad(w, ((0, 0), (0, H_pad - H)))
    b_p = b.reshape(1, H)
    if H_pad != H:
        b_p = jnp.pad(b_p, ((0, 0), (0, H_pad - H)))

    grid = (M_pad // TM,)
    x_bytes = jnp.dtype(x.dtype).itemsize
    w_bytes = jnp.dtype(w.dtype).itemsize
    cost = pl.CostEstimate(
        flops=2 * M_pad * D * H_pad,
        transcendentals=M_pad,  # one rsqrt per row
        bytes_accessed=(M_pad * D + M_pad * H_pad) * x_bytes
        + (D * H_pad + H_pad + 2 * D) * w_bytes,
    )

    out = pl.pallas_call(
        prenorm_linear_kernel,
        out_shape=jax.ShapeDtypeStruct((M_pad, H_pad), x.dtype),
        grid_spec=pltpu.PrefetchScalarGridSpec(
            num_scalar_prefetch=0,
            grid=grid,
            in_specs=[
                pl.BlockSpec((TM, D), lambda i: (i, 0)),       # streamed rows
                pl.BlockSpec((1, D), lambda i: (0, 0)),        # gamma (resident)
                pl.BlockSpec((1, D), lambda i: (0, 0)),        # beta  (resident)
                pl.BlockSpec((D, H_pad), lambda i: (0, 0)),    # weight (resident)
                pl.BlockSpec((1, H_pad), lambda i: (0, 0)),    # bias   (resident)
            ],
            out_specs=pl.BlockSpec((TM, H_pad), lambda i: (i, 0)),
        ),
        compiler_params=pltpu.CompilerParams(
            dimension_semantics=("parallel",)),  # rows independent -> 2 TCs on v7x
        cost_estimate=cost,
    )(xf, gamma2, beta2, w_p, b_p)

    return out[:M, :H].reshape(B, N, H)


if __name__ == "__main__":
    B, N, D, H = 2, 8, 32, 32

    key = jax.random.PRNGKey(0)
    kx, kw, kb = jax.random.split(key, 3)

    x = jax.random.normal(kx, (B, N, D), dtype=jnp.float32)

    # nn.LayerNorm(dim) default init: weight=1, bias=0
    gamma = jnp.ones((D,), dtype=jnp.float32)
    beta = jnp.zeros((D,), dtype=jnp.float32)

    # fn = Linear(D, H), deterministic synthetic params
    w = jax.random.normal(kw, (D, H), dtype=jnp.float32) * 0.02
    b = jax.random.normal(kb, (H,), dtype=jnp.float32) * 0.02

    out = prenorm_linear(x, gamma, beta, w, b)
    out = jax.block_until_ready(out)

    # Reference check in plain JAX (LayerNorm + linear)
    mean = jnp.mean(x, axis=-1, keepdims=True)
    var = jnp.mean((x - mean) ** 2, axis=-1, keepdims=True)
    y_ref = (x - mean) / jnp.sqrt(var + EPS) * gamma + beta
    ref = y_ref @ w + b
    assert jnp.allclose(out, ref, atol=1e-4, rtol=1e-4), "mismatch vs reference"

    print("KERNEL_OK")
</pallas_src>

<mosaic_0001>
module attributes {stable_mosaic.version = 11 : i64} {
  func.func @prenorm_linear_kernel(%arg0: i32, %arg1: memref<16x32xf32, #tpu.memory_space<vmem>>, %arg2: memref<1x32xf32, #tpu.memory_space<vmem>>, %arg3: memref<1x32xf32, #tpu.memory_space<vmem>>, %arg4: memref<32x128xf32, #tpu.memory_space<vmem>>, %arg5: memref<1x128xf32, #tpu.memory_space<vmem>>, %arg6: memref<16x128xf32, #tpu.memory_space<vmem>>) attributes {dimension_semantics = [#tpu.dimension_semantics<parallel>], iteration_bounds = array<i64: 1>, scalar_prefetch = 0 : i64, scratch_operands = 0 : i64, tpu.core_type = #tpu.core_type<tc>, window_params = [{transform_indices = @transform_0, window_bounds = array<i64: 16, 32>}, {pipeline_mode = #tpu.pipeline_mode<synchronous>, transform_indices = @transform_1, window_bounds = array<i64: 1, 32>}, {pipeline_mode = #tpu.pipeline_mode<synchronous>, transform_indices = @transform_2, window_bounds = array<i64: 1, 32>}, {pipeline_mode = #tpu.pipeline_mode<synchronous>, transform_indices = @transform_3, window_bounds = array<i64: 32, 128>}, {pipeline_mode = #tpu.pipeline_mode<synchronous>, transform_indices = @transform_4, window_bounds = array<i64: 1, 128>}, {transform_indices = @transform_5, window_bounds = array<i64: 16, 128>}]} {
    %c0 = arith.constant 0 : index
    %c0_0 = arith.constant 0 : index
    %0 = vector.load %arg1[%c0, %c0_0] : memref<16x32xf32, #tpu.memory_space<vmem>>, vector<16x32xf32>
    %cst = arith.constant dense<0.000000e+00> : vector<16xf32>
    %1 = vector.multi_reduction <add>, %0, %cst [1] : vector<16x32xf32> to vector<16xf32>
    %2 = vector.shape_cast %1 : vector<16xf32> to vector<16x1xf32>
    %cst_1 = arith.constant 3.200000e+01 : f32
    %3 = vector.broadcast %cst_1 : f32 to vector<16x1xf32>
    %4 = arith.divf %2, %3 : vector<16x1xf32>
    %5 = arith.mulf %0, %0 : vector<16x32xf32>
    %cst_2 = arith.constant dense<0.000000e+00> : vector<16xf32>
    %6 = vector.multi_reduction <add>, %5, %cst_2 [1] : vector<16x32xf32> to vector<16xf32>
    %7 = vector.shape_cast %6 : vector<16xf32> to vector<16x1xf32>
    %cst_3 = arith.constant 3.200000e+01 : f32
    %8 = vector.broadcast %cst_3 : f32 to vector<16x1xf32>
    %9 = arith.divf %7, %8 : vector<16x1xf32>
    %10 = arith.mulf %4, %4 : vector<16x1xf32>
    %11 = arith.subf %9, %10 : vector<16x1xf32>
    %cst_4 = arith.constant 0.000000e+00 : f32
    %12 = vector.broadcast %cst_4 : f32 to vector<16x1xf32>
    %13 = arith.maximumf %11, %12 : vector<16x1xf32>
    %cst_5 = arith.constant 9.99999974E-6 : f32
    %14 = vector.broadcast %cst_5 : f32 to vector<16x1xf32>
    %15 = arith.addf %13, %14 : vector<16x1xf32>
    %16 = math.rsqrt %15 : vector<16x1xf32>
    %c0_6 = arith.constant 0 : index
    %c0_7 = arith.constant 0 : index
    %17 = vector.load %arg2[%c0_6, %c0_7] : memref<1x32xf32, #tpu.memory_space<vmem>>, vector<1x32xf32>
    %c0_8 = arith.constant 0 : index
    %c0_9 = arith.constant 0 : index
    %18 = vector.load %arg3[%c0_8, %c0_9] : memref<1x32xf32, #tpu.memory_space<vmem>>, vector<1x32xf32>
    %19 = vector.broadcast %4 : vector<16x1xf32> to vector<16x32xf32>
    %20 = arith.subf %0, %19 : vector<16x32xf32>
    %21 = vector.broadcast %16 : vector<16x1xf32> to vector<16x32xf32>
    %22 = arith.mulf %20, %21 : vector<16x32xf32>
    %23 = vector.broadcast %17 : vector<1x32xf32> to vector<16x32xf32>
    %24 = arith.mulf %22, %23 : vector<16x32xf32>
    %25 = vector.broadcast %18 : vector<1x32xf32> to vector<16x32xf32>
    %26 = arith.addf %24, %25 : vector<16x32xf32>
    %c0_10 = arith.constant 0 : index
    %c0_11 = arith.constant 0 : index
    %27 = vector.load %arg4[%c0_10, %c0_11] : memref<32x128xf32, #tpu.memory_space<vmem>>, vector<32x128xf32>
    %cst_12 = arith.constant dense<0.000000e+00> : vector<16x128xf32>
    %28 = tpu.matmul %26, %27, %cst_12 {dimension_numbers = #tpu.dot_dimension_numbers<[1], [0], [0], [1], [0, 0, 1, 1], [], []>} : vector<16x32xf32>, vector<32x128xf32>, vector<16x128xf32> -> vector<16x128xf32>
    %c0_13 = arith.constant 0 : index
    %c0_14 = arith.constant 0 : index
    %29 = vector.load %arg5[%c0_13, %c0_14] : memref<1x128xf32, #tpu.memory_space<vmem>>, vector<1x128xf32>
    %30 = vector.broadcast %29 : vector<1x128xf32> to vector<16x128xf32>
    %31 = arith.addf %28, %30 : vector<16x128xf32>
    %c0_15 = arith.constant 0 : index
    %c0_16 = arith.constant 0 : index
    %32 = vector.load %arg6[%c0_15, %c0_16] : memref<16x128xf32, #tpu.memory_space<vmem>>, vector<16x128xf32>
    tpu.vector_store %arg6[%c0_15, %c0_16], %31 {strides = array<i32>} : memref<16x128xf32, #tpu.memory_space<vmem>>, vector<16x128xf32>,
    return
  }
  func.func @transform_0(%arg0: i32) -> (i32, i32) {
    %c0_i32 = arith.constant 0 : i32
    %c0_i32_0 = arith.constant 0 : i32
    return %arg0, %c0_i32 : i32, i32
  }
  func.func @transform_1(%arg0: i32) -> (i32, i32) {
    %c0_i32 = arith.constant 0 : i32
    %c0_i32_0 = arith.constant 0 : i32
    %c0_i32_1 = arith.constant 0 : i32
    return %c0_i32, %c0_i32_0 : i32, i32
  }
  func.func @transform_2(%arg0: i32) -> (i32, i32) {
    %c0_i32 = arith.constant 0 : i32
    %c0_i32_0 = arith.constant 0 : i32
    %c0_i32_1 = arith.constant 0 : i32
    return %c0_i32, %c0_i32_0 : i32, i32
  }
  func.func @transform_3(%arg0: i32) -> (i32, i32) {
    %c0_i32 = arith.constant 0 : i32
    %c0_i32_0 = arith.constant 0 : i32
    %c0_i32_1 = arith.constant 0 : i32
    return %c0_i32, %c0_i32_0 : i32, i32
  }
  func.func @transform_4(%arg0: i32) -> (i32, i32) {
    %c0_i32 = arith.constant 0 : i32
    %c0_i32_0 = arith.constant 0 : i32
    %c0_i32_1 = arith.constant 0 : i32
    return %c0_i32, %c0_i32_0 : i32, i32
  }
  func.func @transform_5(%arg0: i32) -> (i32, i32) {
    %c0_i32 = arith.constant 0 : i32
    %c0_i32_0 = arith.constant 0 : i32
    return %arg0, %c0_i32 : i32, i32
  }
}

</mosaic_0001>

<llo_original>
// kernel: tpu_custom_call.1
$region0: #{tpu_custom_call.1}
  #allocation0 [shape = 'u32[]', space=smem, size = 0x4, offset = 0x4, fixed_abs, tag = 'smem constant byte address 0x4 - core index']
  #allocation1 [shape = 'u32[72,128]{1,0:T(1,128)}', space=vmem, size = 0x9000, scoped, tag = 'internal scratch']
  %s0 = inlined_call_operand.hbm [shape: f32[16,32], index: 0, kind: input, shape index: {}]
  %s1 = inlined_call_operand.hbm [shape: f32[1,32], index: 1, kind: input, shape index: {}]
  %s2 = inlined_call_operand.vmem [shape: f32[1,32], index: 2, kind: input, shape index: {}]
  %s3 = inlined_call_operand.hbm [shape: f32[32,128], index: 3, kind: input, shape index: {}]
  %s4 = inlined_call_operand.vmem [shape: f32[1,128], index: 4, kind: input, shape index: {}]
  %s5 = inlined_call_operand.hbm [shape: f32[16,128], index: 5, kind: output, shape index: {}]
  %s6 = sld [smem:[#allocation0]]
  $region42: #{tpu_custom_call.1} parent=0
    _
  %s8 = ssub.s32 1, %s6
  %s9 = scalar_select 0, %s8, %s6
  $region1: #{tpu_custom_call.1} parent=0
    #allocation2 [shape = 'u8[8192]{0}', space=vmem, size = 0x2000, scoped, tag = 'input window, operand 0, single buffered']
    #allocation3 [shape = 's32[1]{0}', space=sflag, size = 0x4, scoped, tag = 'scoped memory for tpu_custom_call.1']
    #allocation4 [shape = 's32[1]{0}', space=sflag, size = 0x4, scoped, tag = 'scoped memory for tpu_custom_call.1']
    #allocation5 [shape = 'u8[512]{0}', space=vmem, size = 0x400, scoped, tag = 'input window, operand 1, single buffered']
    #allocation6 [shape = 's32[1]{0}', space=sflag, size = 0x4, scoped, tag = 'scoped memory for tpu_custom_call.1']
    #allocation7 [shape = 'u8[16384]{0}', space=vmem, size = 0x4000, scoped, tag = 'input window, operand 3, single buffered']
    #allocation8 [shape = 'u8[8192]{0}', space=vmem, size = 0x2000, scoped, tag = 'output window, operand 0, single buffered']
    %10 = vsyncpa [#allocation3], 0
    %11 = vsyncpa [#allocation6], 0
    %12 = vsyncpa [#allocation4], 0
    // Predicated region
    $region2: #{tpu_custom_call.1} parent=1 // pred_check
      _
    $region3: #{tpu_custom_call.1} parent=1 // pred_check_branch
      %14 = sbr.rel (0) target = $region5
    $region4: #{tpu_custom_call.1} parent=1 // pred_region
      %16 = vsyncadd [#allocation3], 0
      %s17 = sshll.u32 %s0, 4
      %s18 = int_to_ptr.hbm [resolvable:$true] %s17
      %s19 = sshll.u32 [#allocation2], 4
      %s20 = int_to_ptr.vmem [resolvable:$true] %s19
      %25 = dma.hbm_to_vmem [thread:$0]  %s18, 256, %s20, [#allocation3], 128, 128, 8
    $region5: #{tpu_custom_call.1} parent=1 // pred_fallthru
      _
    // Predicated region
    $region6: #{tpu_custom_call.1} parent=1 // pred_check
      _
    $region7: #{tpu_custom_call.1} parent=1 // pred_check_branch
      %27 = sbr.rel (0) target = $region9
    $region8: #{tpu_custom_call.1} parent=1 // pred_region
      %29 = vsyncadd [#allocation6], 0
      %s31 = sshll.u32 %s1, 4
      %s32 = int_to_ptr.hbm [resolvable:$true] %s31
      %s33 = sshll.u32 [#allocation5], 4
      %s34 = int_to_ptr.vmem [resolvable:$true] %s33
      %36 = dma.hbm_to_vmem [thread:$0]  %s32, 16, %s34, [#allocation6]
    $region9: #{tpu_custom_call.1} parent=1 // pred_fallthru
      _
    // Predicated region
    $region10: #{tpu_custom_call.1} parent=1 // pred_check
      _
    $region11: #{tpu_custom_call.1} parent=1 // pred_check_branch
      %38 = sbr.rel (0) target = $region13
    $region12: #{tpu_custom_call.1} parent=1 // pred_region
      _
    $region13: #{tpu_custom_call.1} parent=1 // pred_fallthru
      _
    // Predicated region
    $region14: #{tpu_custom_call.1} parent=1 // pred_check
      _
    $region15: #{tpu_custom_call.1} parent=1 // pred_check_branch
      %40 = sbr.rel (0) target = $region17
    $region16: #{tpu_custom_call.1} parent=1 // pred_region
      %42 = vsyncadd [#allocation6], 0
      %s43 = sshll.u32 %s3, 4
      %s44 = int_to_ptr.hbm [resolvable:$true] %s43
      %s45 = sshll.u32 [#allocation7], 4
      %s46 = int_to_ptr.vmem [resolvable:$true] %s45
      %51 = dma.hbm_to_vmem [thread:$0]  %s44, 512, %s46, [#allocation6], 128, 128, 8
    $region17: #{tpu_custom_call.1} parent=1 // pred_fallthru
      _
    // Predicated region
    $region18: #{tpu_custom_call.1} parent=1 // pred_check
      _
    $region19: #{tpu_custom_call.1} parent=1 // pred_check_branch
      %53 = sbr.rel (0) target = $region21
    $region20: #{tpu_custom_call.1} parent=1 // pred_region
      _
    $region21: #{tpu_custom_call.1} parent=1 // pred_fallthru
      _
    // Predicated region
    $region22: #{tpu_custom_call.1} parent=1 // pred_check
      _
    $region23: #{tpu_custom_call.1} parent=1 // pred_check_branch
      %55 = sbr.rel (0) target = $region25
    $region24: #{tpu_custom_call.1} parent=1 // pred_region
      %57 = dma.done [#allocation3], 256
    $region25: #{tpu_custom_call.1} parent=1 // pred_fallthru
      _
    // Predicated region
    $region26: #{tpu_custom_call.1} parent=1 // pred_check
      _
    $region27: #{tpu_custom_call.1} parent=1 // pred_check_branch
      %59 = sbr.rel (0) target = $region29
    $region28: #{tpu_custom_call.1} parent=1 // pred_region
      %61 = dma.done [#allocation6], 16
    $region29: #{tpu_custom_call.1} parent=1 // pred_fallthru
      _
    // Predicated region
    $region30: #{tpu_custom_call.1} parent=1 // pred_check
      _
    $region31: #{tpu_custom_call.1} parent=1 // pred_check_branch
      %63 = sbr.rel (0) target = $region33
    $region32: #{tpu_custom_call.1} parent=1 // pred_region
      %65 = dma.done [#allocation6], 512
    $region33: #{tpu_custom_call.1} parent=1 // pred_fallthru
      _
    %v66 = vld [vmem:[#allocation2] sm:$0xff]
    %v67 = vld [vmem:[#allocation2 + $0x8] sm:$0xff]
    %vm68 = vcmask 261120
    %v69 = vsel %vm68, %v66, 0.0
    %70 = vadd.xlane.f32.xlu0 %v69
    %v71 = vpop.xlane.xlu0 %70
    %v72 = vsel %vm68, %v67, 0.0
    %73 = vadd.xlane.f32.xlu0 %v72
    %v74 = vpop.xlane.xlu0 %73
    %v75 = vrcp.pop 32.0
    %v76 = vmul.f32 32.0, %v75
    %v77 = vsub.f32 1.0, %v76
    %v78 = vmul.f32 %v75, %v77
    %v79 = vadd.f32 %v75, %v78
    %vm80 = vweird.f32 %v75
    %v81 = vsel %vm80, %v75, %v79
    %v82 = vmul.f32 %v71, %v81
    %v83 = vmul.f32 %v74, %v81
    %v84 = vmul.f32 %v66, %v66
    %v85 = vmul.f32 %v67, %v67
    %v86 = vsel %vm68, %v84, 0.0
    %87 = vadd.xlane.f32.xlu0 %v86
    %v88 = vpop.xlane.xlu0 %87
    %v89 = vsel %vm68, %v85, 0.0
    %90 = vadd.xlane.f32.xlu0 %v89
    %v91 = vpop.xlane.xlu0 %90
    %v92 = vmul.f32 %v88, %v81
    %v93 = vmul.f32 %v91, %v81
    %v94 = vmul.f32 %v82, %v82
    %v95 = vmul.f32 %v83, %v83
    %v96 = vsub.f32 %v92, %v94
    %v97 = vsub.f32 %v93, %v95
    %v98 = vmax.f32 %v96, 0.0
    %v99 = vmax.f32 %v97, 0.0
    %v100 = vadd.f32 %v98, 1e-05
    %v101 = vadd.f32 %v99, 1e-05
    %v102 = vrsqrt.pop %v100
    %v103 = vmul.f32 %v102, %v100
    %v104 = vmul.f32 %v103, %v102
    %v105 = vmul.f32 0.5, %v104
    %v106 = vsub.f32 1.5, %v105
    %v107 = vmul.f32 %v102, %v106
    %vm108 = vweird.f32 %v100
    %vm109 = vweird.f32 %v102
    %vm110 = vmor %vm108, %vm109
    %v111 = vsel %vm110, %v102, %v107
    %v112 = vrsqrt.pop %v101
    %v113 = vmul.f32 %v112, %v101
    %v114 = vmul.f32 %v113, %v112
    %v115 = vmul.f32 0.5, %v114
    %v116 = vsub.f32 1.5, %v115
    %v117 = vmul.f32 %v112, %v116
    %vm118 = vweird.f32 %v101
    %vm119 = vweird.f32 %v112
    %vm120 = vmor %vm118, %vm119
    %v121 = vsel %vm120, %v112, %v117
    %v122 = vld [vmem:[#allocation5] sm:$0x1]
    %v123 = vld [vmem:[%s2] sm:$0x1]
    %v124 = vsub.f32 %v66, %v82
    %v125 = vsub.f32 %v67, %v83
    %v126 = vmul.f32 %v124, %v111
    %v127 = vmul.f32 %v125, %v121
    %v129 = vperm.slane %v122, 0
    %v131 = vmul.f32 %v126, %v129
    %v132 = vmul.f32 %v127, %v129
    %v134 = vperm.slane %v123, 0
    %v136 = vadd.f32 %v131, %v134
    %v137 = vadd.f32 %v132, %v134
    %v138 = vld [vmem:[#allocation7] sm:$0xff]
    %v139 = vld [vmem:[#allocation7 + $0x8] sm:$0xff]
    %v140 = vld [vmem:[#allocation7 + $0x10] sm:$0xff]
    %v141 = vld [vmem:[#allocation7 + $0x18] sm:$0xff]
    %v142 = vld [vmem:[%s4] sm:$0x1]
    %v144 = vperm.slane %v142, 0
    %v147 = vsel %vm68, %v136, 0
    %v150 = vsel %vm68, %v137, 0
    %152 = vmatpush.msra.mxu0 0.0
    %153 = vmatpush.msra.mxu0 0.0
    %154 = vmatpush.msra.mxu0 0.0
    %155 = vmatpush.msra.mxu0 0.0
    %156 = vmatpush.msra.mxu0 0.0
    %157 = vmatpush.msra.mxu0 0.0
    %158 = vmatpush.msra.mxu0 0.0
    %159 = vmatpush.msra.mxu0 0.0
    %160 = vmatpush.msra.mxu0 0.0
    %161 = vmatpush.msra.mxu0 0.0
    %162 = vmatpush.msra.mxu0 0.0
    %163 = vmatpush.msra.mxu0 0.0
    %164 = vmatpush.msra.mxu0 %v141
    %165 = vmatpush.msra.mxu0 %v140
    %166 = vmatpush.msra.mxu0 %v139
    %167 = vmatpush.msra.mxu0 %v138
    %168 = vmatmul.f32.gmra.mxu0 %v147
    %v169 = vpop.f32.mrf.mxu0
    %v170 = vadd.f32 %v144, %v169
    %171 = vmatmul.f32.gmra.mxu0 %v150
    %v172 = vpop.f32.mrf.mxu0
    %v173 = vadd.f32 %v144, %v172
    %174 = vdwg.mxu0
    %175 = vst [vmem:[#allocation8] sm:$0xff] %v170
    %176 = vst [vmem:[#allocation8 + $0x8] sm:$0xff] %v173
    // Predicated region
    $region34: #{tpu_custom_call.1} parent=1 // pred_check
      _
    $region35: #{tpu_custom_call.1} parent=1 // pred_check_branch
      %178 = sbr.rel (0) target = $region37
    $region36: #{tpu_custom_call.1} parent=1 // pred_region
      %180 = vsyncadd [#allocation4], 0
      %s181 = sshll.u32 [#allocation8], 4
      %s182 = int_to_ptr.vmem [resolvable:$true] %s181
      %s183 = sshll.u32 %s5, 4
      %s184 = int_to_ptr.hbm [resolvable:$true] %s183
      %189 = dma.vmem_to_hbm [thread:$0]  %s182, 256, %s184, [#allocation4], 128, 128, 8
    $region37: #{tpu_custom_call.1} parent=1 // pred_fallthru
      _
    // Predicated region
    $region38: #{tpu_custom_call.1} parent=1 // pred_check
      _
    $region39: #{tpu_custom_call.1} parent=1 // pred_check_branch
      %191 = sbr.rel (0) target = $region41
    $region40: #{tpu_custom_call.1} parent=1 // pred_region
      %193 = dma.done [#allocation4], 256
    $region41: #{tpu_custom_call.1} parent=1 // pred_fallthru
      _
    %194 = vsyncpa [#allocation3], 1
    %195 = vsyncpa [#allocation6], 1
    %196 = vsyncpa [#allocation4], 1

</llo_original>
